<compile_context>
chip_gen: v6e
topology: v6e:2x2x1
jax: 0.10.0
libtpu: 0.0.40
codegen_flags: <defaults>
</compile_context>

<pallas_src>
import math

import jax
import jax.numpy as jnp
from jax.experimental import pallas as pl
from jax.experimental.pallas import tpu as pltpu


# Chunk sizing for the HBM->HBM DMA copy (materialize path).  There is no VMEM
# budget to respect; these only control how many DMA descriptors (grid steps)
# we issue.  ~8 MiB chunks keep the ~0.35 us per-step overhead <1% even at
# v7x's ~3.2 TB/s HBM, while >=2 chunks lets dimension_semantics=("parallel",)
# split the work across v7x's two TensorCores.
_TARGET_CHUNK_BYTES = 8 << 20
_MIN_CHUNK_BYTES = 1 << 20


def _dma_copy_kernel(x_hbm, o_hbm, sem):
    # One direct HBM->HBM DMA per grid step: chunk i of input -> chunk i of out.
    i = pl.program_id(0)
    cp = pltpu.make_async_copy(x_hbm.at[i], o_hbm.at[i], sem)
    cp.start()
    cp.wait()


def _choose_num_chunks(n_elems, itemsize):
    """Pick a divisor of n_elems giving ~_TARGET_CHUNK_BYTES chunks (>=2 if possible)."""
    nbytes = n_elems * itemsize
    if nbytes <= _MIN_CHUNK_BYTES:
        return 1
    target = max(2, (nbytes + _TARGET_CHUNK_BYTES - 1) // _TARGET_CHUNK_BYTES)
    divisors = set()
    d = 1
    while d * d <= n_elems:
        if n_elems % d == 0:
            divisors.add(d)
            divisors.add(n_elems // d)
        d += 1
    candidates = [c for c in divisors
                  if c >= 2 and (n_elems // c) * itemsize >= _MIN_CHUNK_BYTES]
    if not candidates:
        # e.g. prime element count: one whole-array DMA (still roofline-bound).
        return 1
    return min(candidates, key=lambda c: (abs(c - target), c))


def _pallas_materialized_copy(slab):
    """Identity copy of a (num_chunks, chunk) slab via direct HBM->HBM DMA."""
    num_chunks, chunk = slab.shape
    nbytes = num_chunks * chunk * jnp.dtype(slab.dtype).itemsize
    return pl.pallas_call(
        _dma_copy_kernel,
        out_shape=jax.ShapeDtypeStruct((num_chunks, chunk), slab.dtype),
        grid_spec=pltpu.PrefetchScalarGridSpec(
            num_scalar_prefetch=0,
            grid=(num_chunks,),
            in_specs=[pl.BlockSpec(memory_space=pl.ANY)],   # raw HBM ref, no auto-DMA
            out_specs=pl.BlockSpec(memory_space=pl.ANY),    # raw HBM ref, written by DMA
            scratch_shapes=[pltpu.SemaphoreType.DMA(())],
        ),
        compiler_params=pltpu.CompilerParams(
            dimension_semantics=("parallel",),
            has_side_effects=True,
        ),
        cost_estimate=pl.CostEstimate(
            flops=0, transcendentals=0, bytes_accessed=2 * nbytes),
    )(slab)


def reshape_forward(x, outer_shape, *, materialize=False, num_chunks=None):
    """Pallas/JAX equivalent of Reshape(outer_shape)(x) == x.view(x.size(0), *outer_shape).

    materialize=False (default): metadata-only reshape, zero data movement.
    materialize=True: force a fresh HBM buffer via the Pallas HBM->HBM DMA kernel.
    num_chunks: optional override for the number of DMA chunks (must divide numel).
    """
    b = x.shape[0]
    flat = int(math.prod(x.shape[1:]))

    # torch.view supports a single inferred (-1) dimension.
    outer = list(outer_shape)
    if outer.count(-1) > 1:
        raise ValueError("only one dimension may be -1")
    if outer.count(-1) == 1:
        known = int(math.prod([d for d in outer if d != -1]))
        if known == 0 or flat % known != 0:
            raise ValueError(f"cannot infer -1 for per-batch size {flat} and {outer_shape}")
        outer[outer.index(-1)] = flat // known
    target_flat = int(math.prod(outer))
    if flat != target_flat:
        raise ValueError(f"cannot view tensor of per-batch size {flat} as {tuple(outer)}")
    out_shape = (b,) + tuple(outer)

    if not materialize:
        # Row-major view needs no data movement; XLA emits a bitcast.
        return jnp.reshape(x, out_shape)

    n = b * flat
    if n == 0:
        return jnp.reshape(x, out_shape)

    itemsize = jnp.dtype(x.dtype).itemsize
    if num_chunks is None:
        num_chunks = _choose_num_chunks(n, itemsize)
    if n % num_chunks != 0:
        raise ValueError(f"num_chunks={num_chunks} does not divide numel={n}")

    slab = x.reshape(num_chunks, n // num_chunks)   # contiguous, row-major, metadata-only
    return _pallas_materialized_copy(slab).reshape(out_shape)


if __name__ == "__main__":
    key = jax.random.PRNGKey(0)
    # Small NCHW-like input: batch=2, channels=4, spatial=16x16.
    x = jax.random.normal(key, (2, 4, 16, 16), dtype=jnp.float32)

    # Reshape module: view(batch, 4, 256)  (4 * 16 * 16 == 4 * 256)
    outer_shape = (4, 256)
    expected = x.reshape((x.shape[0],) + outer_shape)

    # Default path: metadata-only reshape (recommended, zero data movement).
    out_view = reshape_forward(x, outer_shape)
    # Pallas HBM->HBM DMA path: single-chunk (auto) and multi-chunk (parallel grid).
    out_copy = reshape_forward(x, outer_shape, materialize=True)
    out_copy4 = reshape_forward(x, outer_shape, materialize=True, num_chunks=4)
    # Sub-32-bit dtype: the DMA path has no sublane-packing constraints.
    x_bf16 = x.astype(jnp.bfloat16)
    out_bf16 = reshape_forward(x_bf16, outer_shape, materialize=True, num_chunks=2)

    out_view, out_copy, out_copy4, out_bf16 = jax.block_until_ready(
        (out_view, out_copy, out_copy4, out_bf16))

    assert out_view.shape == (2, 4, 256), out_view.shape
    assert out_copy.shape == (2, 4, 256), out_copy.shape
    assert out_copy.dtype == x.dtype
    assert out_bf16.dtype == jnp.bfloat16
    assert bool(jnp.array_equal(out_view, expected))
    assert bool(jnp.array_equal(out_copy, expected))
    assert bool(jnp.array_equal(out_copy4, expected))
    assert bool(jnp.array_equal(out_bf16, x_bf16.reshape((2,) + outer_shape)))

    print("KERNEL_OK")
</pallas_src>

<mosaic_0001>
module attributes {stable_mosaic.version = 11 : i64} {
  func.func @_dma_copy_kernel(%arg0: i32, %arg1: memref<1x2048xf32, #tpu.memory_space<any>>, %arg2: memref<1x2048xf32, #tpu.memory_space<any>>, %arg3: memref<!tpu.dma_semaphore, #tpu.memory_space<semaphore_mem>>) attributes {dimension_semantics = [#tpu.dimension_semantics<parallel>], iteration_bounds = array<i64: 1>, scalar_prefetch = 0 : i64, scratch_operands = 1 : i64, tpu.core_type = #tpu.core_type<tc>, window_params = [{}, {}]} {
    %c0_i32 = arith.constant 0 : i32
    %0 = tpu.memref_slice %arg1[%arg0, %c0_i32] : memref<1x2048xf32, #tpu.memory_space<any>> -> memref<1x2048xf32, #tpu.memory_space<any>>
    %1 = tpu.memref_squeeze %0 : memref<1x2048xf32, #tpu.memory_space<any>> -> memref<2048xf32, #tpu.memory_space<any>>
    %c0_i32_0 = arith.constant 0 : i32
    %2 = tpu.memref_slice %arg2[%arg0, %c0_i32_0] : memref<1x2048xf32, #tpu.memory_space<any>> -> memref<1x2048xf32, #tpu.memory_space<any>>
    %3 = tpu.memref_squeeze %2 : memref<1x2048xf32, #tpu.memory_space<any>> -> memref<2048xf32, #tpu.memory_space<any>>
    tpu.enqueue_dma source(%1 : memref<2048xf32, #tpu.memory_space<any>>) target(%3 : memref<2048xf32, #tpu.memory_space<any>>) target_semaphore(%arg3 : memref<!tpu.dma_semaphore, #tpu.memory_space<semaphore_mem>>)
    %c0_i32_1 = arith.constant 0 : i32
    %4 = tpu.memref_slice %arg1[%arg0, %c0_i32_1] : memref<1x2048xf32, #tpu.memory_space<any>> -> memref<1x2048xf32, #tpu.memory_space<any>>
    %5 = tpu.memref_squeeze %4 : memref<1x2048xf32, #tpu.memory_space<any>> -> memref<2048xf32, #tpu.memory_space<any>>
    %c0_i32_2 = arith.constant 0 : i32
    %6 = tpu.memref_slice %arg2[%arg0, %c0_i32_2] : memref<1x2048xf32, #tpu.memory_space<any>> -> memref<1x2048xf32, #tpu.memory_space<any>>
    %7 = tpu.memref_squeeze %6 : memref<1x2048xf32, #tpu.memory_space<any>> -> memref<2048xf32, #tpu.memory_space<any>>
    tpu.wait_dma2 semaphore(%arg3 : memref<!tpu.dma_semaphore, #tpu.memory_space<semaphore_mem>>) src(%5 : memref<2048xf32, #tpu.memory_space<any>>) dst(%7 : memref<2048xf32, #tpu.memory_space<any>>)
    return
  }
}

</mosaic_0001>

<llo_original>
// kernel: tpu_custom_call.1
$region0: #{tpu_custom_call.1}
  #allocation0 [shape = 'u32[]', space=smem, size = 0x4, offset = 0x4, fixed_abs, tag = 'smem constant byte address 0x4 - core index']
  #allocation1 [shape = 'u32[144,128]{1,0:T(1,128)}', space=vmem, size = 0x12000, scoped, tag = 'internal scratch']
  #allocation2 [shape = 's32[1]{0}', space=sflag, size = 0x4, scoped, tag = 'scratch operand']
  #allocation3 [shape = 's32[]', space=sflag, size = 0x4, offset = 0, fixed_abs, tag = 'sflag constant byte address 0x0 - dummy sync flag']
  #allocation4 [shape = 'u32[0]{0}', space=smem, size = 0, offset = 0, fixed_abs, tag = 'smem constant byte address 0x0 - null']
  %s0 = inlined_call_operand.hbm [shape: f32[1,2048], index: 0, kind: input, shape index: {}]
  %s1 = inlined_call_operand.hbm [shape: f32[1,2048], index: 1, kind: output, shape index: {}]
  %s2 = sld [smem:[#allocation0]]
  $region2: #{tpu_custom_call.1} parent=0
    _
  %s4 = ssub.s32 1, %s2
  %s5 = scalar_select 0, %s4, %s2
  %s6 = smul.u32 0, 16
  %s7 = smul.addr %s6, 16
  %s8 = scalar_lea.hbm %s0, %s7
  %s9 = smul.addr %s6, 16
  %s10 = scalar_lea.hbm %s1, %s9
  %s12 = sshll.u32 1, 14
  %s13 = sxor.u32 4294967295, %s12
  %17 = dma.general %s8, 256, %s10, [#allocation2], 131072, [#allocation4], 0, 0
  %19 = dma.done [#allocation2], 256
  %20 = vsyncmov [#allocation2]
  %s21 = vpop.sfrf %20
  %p22 = scmp.eq.s32.totalorder %s21, 0
  %p23 = pneg %p22
  %25 = shalt.err (%p23)

</llo_original>
